<compile_context>
chip_gen: v6e
topology: v6e:2x2x1
jax: 0.10.0
libtpu: 0.0.40
codegen_flags: <defaults>
</compile_context>

<pallas_src>
import jax
import jax.numpy as jnp
from jax.experimental import pallas as pl
from jax.experimental.pallas import tpu as pltpu

EPS = 1e-5
NEG_SLOPE = 0.01
LANE = 128


def _round_up(n, m=LANE):
    return ((n + m - 1) // m) * m


def _decoder_kernel(
    z_ref,
    w1_ref, g1_ref, be1_ref,
    w2_ref, g2_ref, be2_ref,
    w3_ref, g3_ref, be3_ref,
    w4_ref, g4_ref, be4_ref,
    out_ref,
):
    """Whole decoder forward in one invocation (all tensors VMEM-resident)."""

    def lin_bn(h, w_ref, g_ref, be_ref):
        w = w_ref[...]
        # MXU matmul, f32 accumulation.  Operands may be bf16 (v6e/v7x fast
        # path) or f32; activations stay f32 either way.
        y = jnp.dot(h.astype(w.dtype), w, preferred_element_type=jnp.float32)
        # BatchNorm1d, training-mode batch statistics (biased variance).
        # Linear bias omitted: BN's mean subtraction cancels it exactly.
        mu = jnp.mean(y, axis=0, keepdims=True)
        d = y - mu
        var = jnp.mean(d * d, axis=0, keepdims=True)
        # TODO(synk): for large B, compute mu / E[d^2] with (1,B)@(B,F)
        # matmuls so the batch reduction rides the (otherwise idle) MXU.
        scale = g_ref[...] * jax.lax.rsqrt(var + EPS)   # (1,F) row op
        return d * scale + be_ref[...]

    def lrelu(h):
        return jnp.where(h >= 0, h, NEG_SLOPE * h)

    h = z_ref[...]
    h = lrelu(lin_bn(h, w1_ref, g1_ref, be1_ref))
    h = lrelu(lin_bn(h, w2_ref, g2_ref, be2_ref))
    h = lrelu(lin_bn(h, w3_ref, g3_ref, be3_ref))
    h = lin_bn(h, w4_ref, g4_ref, be4_ref)
    out_ref[...] = jax.nn.sigmoid(h)


def _pad2(a, rows, cols):
    return jnp.pad(a, ((0, rows - a.shape[0]), (0, cols - a.shape[1])))


def prepare_params(params, dot_dtype=jnp.float32):
    """One-time padding / dtype prep (hoisted out of the per-call path).

    Returns the padded weight/gamma/beta tuple the kernel consumes.  Biases
    are intentionally dropped (training-mode BN cancels them exactly).
    """
    latent_dim = params["w1"].shape[0]
    input_dim = params["w4"].shape[1]
    dims = [latent_dim,
            params["w1"].shape[1],
            params["w2"].shape[1],
            params["w3"].shape[1],
            input_dim]
    pdims = [_round_up(d) for d in dims]

    args = []
    for li in range(1, 5):
        fi, fo = pdims[li - 1], pdims[li]
        args.append(_pad2(params[f"w{li}"], fi, fo).astype(dot_dtype))  # W (in, out)
        args.append(_pad2(params[f"g{li}"], 1, fo))                     # gamma (1, out) f32
        args.append(_pad2(params[f"be{li}"], 1, fo))                    # beta  (1, out) f32

    return {
        "args": tuple(jax.device_put(a) for a in args),
        "latent_pad": pdims[0],
        "out_pad": pdims[4],
        "input_dim": input_dim,
    }


def decoder_forward(z, prepped):
    """z: (B, latent_dim) f32.  prepped: output of prepare_params."""
    batch, latent_dim = z.shape

    # Per-call work is only this tiny z pad; all weight padding is one-time.
    z_p = jnp.pad(z, ((0, 0), (0, prepped["latent_pad"] - latent_dim)))

    args = (z_p,) + prepped["args"]
    vmem = pltpu.MemorySpace.VMEM
    in_specs = [pl.BlockSpec(memory_space=vmem) for _ in args]
    out_shape = jax.ShapeDtypeStruct((batch, prepped["out_pad"]), jnp.float32)

    out_p = pl.pallas_call(
        _decoder_kernel,
        out_shape=out_shape,
        in_specs=in_specs,
        out_specs=pl.BlockSpec(memory_space=vmem),
        compiler_params=pltpu.CompilerParams(vmem_limit_bytes=32 * 1024 * 1024),
    )(*args)

    # Slice the real output columns back out (padded cols hold sigmoid(0)=0.5).
    return out_p[:, :prepped["input_dim"]]


def init_params(key, latent_dim, intermediate_dim, input_dim):
    """Deterministic synthetic init (PyTorch default uniform). W is (in, out)."""
    dim_1 = intermediate_dim * 4
    dim_2 = intermediate_dim * 2
    layer_dims = [
        (latent_dim, intermediate_dim),
        (intermediate_dim, dim_2),
        (dim_2, dim_1),
        (dim_1, input_dim),
    ]
    params = {}
    keys = jax.random.split(key, len(layer_dims))
    for li, (k, (fan_in, fan_out)) in enumerate(zip(keys, layer_dims), start=1):
        kw, kb = jax.random.split(k)
        bound = 1.0 / jnp.sqrt(fan_in)
        params[f"w{li}"] = jax.random.uniform(
            kw, (fan_in, fan_out), jnp.float32, -bound, bound
        )
        params[f"b{li}"] = jax.random.uniform(
            kb, (1, fan_out), jnp.float32, -bound, bound
        )
        # BatchNorm affine params at init: gamma=1, beta=0
        params[f"g{li}"] = jnp.ones((1, fan_out), jnp.float32)
        params[f"be{li}"] = jnp.zeros((1, fan_out), jnp.float32)
    return params


def _reference(z, p):
    """Pure-JAX reference (unpadded, bias included) matching the nn.Module."""

    def lin_bn(h, w, b, g, be):
        y = h @ w + b
        mu = y.mean(axis=0, keepdims=True)
        var = ((y - mu) ** 2).mean(axis=0, keepdims=True)
        return (y - mu) / jnp.sqrt(var + EPS) * g + be

    def lrelu(h):
        return jnp.where(h >= 0, h, NEG_SLOPE * h)

    h = lrelu(lin_bn(z, p["w1"], p["b1"], p["g1"], p["be1"]))
    h = lrelu(lin_bn(h, p["w2"], p["b2"], p["g2"], p["be2"]))
    h = lrelu(lin_bn(h, p["w3"], p["b3"], p["g3"], p["be3"]))
    h = lin_bn(h, p["w4"], p["b4"], p["g4"], p["be4"])
    return jax.nn.sigmoid(h)


if __name__ == "__main__":
    latent_dim = 8
    intermediate_dim = 32   # -> hidden dims 32, 64, 128
    input_dim = 16
    batch = 8

    key = jax.random.PRNGKey(0)
    k_z, k_p = jax.random.split(key)
    z = jax.random.normal(k_z, (batch, latent_dim), jnp.float32)
    params = init_params(k_p, latent_dim, intermediate_dim, input_dim)
    ref = _reference(z, params)

    # --- f32 MXU path (matches PyTorch-default numerics at 1e-4) -----------
    prepped_f32 = prepare_params(params, dot_dtype=jnp.float32)
    out = decoder_forward(z, prepped_f32)
    jax.block_until_ready(out)
    assert out.shape == (batch, input_dim)
    assert bool(jnp.all((out >= 0.0) & (out <= 1.0)))
    assert jnp.allclose(out, ref, atol=1e-4, rtol=1e-4)

    # --- bf16-operand MXU path (v6e/v7x fast path; BN/activations stay f32) -
    prepped_bf16 = prepare_params(params, dot_dtype=jnp.bfloat16)
    out_bf16 = decoder_forward(z, prepped_bf16)
    jax.block_until_ready(out_bf16)
    assert out_bf16.shape == (batch, input_dim)
    assert bool(jnp.all((out_bf16 >= 0.0) & (out_bf16 <= 1.0)))
    assert jnp.allclose(out_bf16, ref, atol=2e-2, rtol=2e-2)

    print("KERNEL_OK")
</pallas_src>

<mosaic_0001>
module attributes {stable_mosaic.version = 11 : i64} {
  func.func @_decoder_kernel(%arg0: memref<8x128xf32, #tpu.memory_space<vmem>>, %arg1: memref<128x128xf32, #tpu.memory_space<vmem>>, %arg2: memref<1x128xf32, #tpu.memory_space<vmem>>, %arg3: memref<1x128xf32, #tpu.memory_space<vmem>>, %arg4: memref<128x128xf32, #tpu.memory_space<vmem>>, %arg5: memref<1x128xf32, #tpu.memory_space<vmem>>, %arg6: memref<1x128xf32, #tpu.memory_space<vmem>>, %arg7: memref<128x128xf32, #tpu.memory_space<vmem>>, %arg8: memref<1x128xf32, #tpu.memory_space<vmem>>, %arg9: memref<1x128xf32, #tpu.memory_space<vmem>>, %arg10: memref<128x128xf32, #tpu.memory_space<vmem>>, %arg11: memref<1x128xf32, #tpu.memory_space<vmem>>, %arg12: memref<1x128xf32, #tpu.memory_space<vmem>>, %arg13: memref<8x128xf32, #tpu.memory_space<vmem>>) attributes {dimension_semantics = [], scalar_prefetch = 0 : i64, scratch_operands = 0 : i64, tpu.core_type = #tpu.core_type<tc>} {
    %c0 = arith.constant 0 : index
    %c0_0 = arith.constant 0 : index
    %0 = vector.load %arg0[%c0, %c0_0] : memref<8x128xf32, #tpu.memory_space<vmem>>, vector<8x128xf32>
    %c0_1 = arith.constant 0 : index
    %c0_2 = arith.constant 0 : index
    %1 = vector.load %arg1[%c0_1, %c0_2] : memref<128x128xf32, #tpu.memory_space<vmem>>, vector<128x128xf32>
    %cst = arith.constant dense<0.000000e+00> : vector<8x128xf32>
    %2 = tpu.matmul %0, %1, %cst {dimension_numbers = #tpu.dot_dimension_numbers<[1], [0], [0], [1], [0, 0, 1, 1], [], []>} : vector<8x128xf32>, vector<128x128xf32>, vector<8x128xf32> -> vector<8x128xf32>
    %cst_3 = arith.constant dense<0.000000e+00> : vector<128xf32>
    %3 = vector.multi_reduction <add>, %2, %cst_3 [0] : vector<8x128xf32> to vector<128xf32>
    %4 = vector.shape_cast %3 : vector<128xf32> to vector<1x128xf32>
    %cst_4 = arith.constant 8.000000e+00 : f32
    %5 = vector.broadcast %cst_4 : f32 to vector<1x128xf32>
    %6 = arith.divf %4, %5 : vector<1x128xf32>
    %7 = vector.broadcast %6 : vector<1x128xf32> to vector<8x128xf32>
    %8 = arith.subf %2, %7 : vector<8x128xf32>
    %9 = arith.mulf %8, %8 : vector<8x128xf32>
    %cst_5 = arith.constant dense<0.000000e+00> : vector<128xf32>
    %10 = vector.multi_reduction <add>, %9, %cst_5 [0] : vector<8x128xf32> to vector<128xf32>
    %11 = vector.shape_cast %10 : vector<128xf32> to vector<1x128xf32>
    %cst_6 = arith.constant 8.000000e+00 : f32
    %12 = vector.broadcast %cst_6 : f32 to vector<1x128xf32>
    %13 = arith.divf %11, %12 : vector<1x128xf32>
    %c0_7 = arith.constant 0 : index
    %c0_8 = arith.constant 0 : index
    %14 = vector.load %arg2[%c0_7, %c0_8] : memref<1x128xf32, #tpu.memory_space<vmem>>, vector<1x128xf32>
    %cst_9 = arith.constant 9.99999974E-6 : f32
    %15 = vector.broadcast %cst_9 : f32 to vector<1x128xf32>
    %16 = arith.addf %13, %15 : vector<1x128xf32>
    %17 = math.rsqrt %16 : vector<1x128xf32>
    %18 = arith.mulf %14, %17 : vector<1x128xf32>
    %19 = vector.broadcast %18 : vector<1x128xf32> to vector<8x128xf32>
    %20 = arith.mulf %8, %19 : vector<8x128xf32>
    %c0_10 = arith.constant 0 : index
    %c0_11 = arith.constant 0 : index
    %21 = vector.load %arg3[%c0_10, %c0_11] : memref<1x128xf32, #tpu.memory_space<vmem>>, vector<1x128xf32>
    %22 = vector.broadcast %21 : vector<1x128xf32> to vector<8x128xf32>
    %23 = arith.addf %20, %22 : vector<8x128xf32>
    %cst_12 = arith.constant 0.000000e+00 : f32
    %24 = vector.broadcast %cst_12 : f32 to vector<8x128xf32>
    %25 = arith.cmpf oge, %23, %24 : vector<8x128xf32>
    %cst_13 = arith.constant 0.00999999977 : f32
    %26 = vector.broadcast %cst_13 : f32 to vector<8x128xf32>
    %27 = arith.mulf %26, %23 : vector<8x128xf32>
    %28 = arith.select %25, %23, %27 : vector<8x128xi1>, vector<8x128xf32>
    %c0_14 = arith.constant 0 : index
    %c0_15 = arith.constant 0 : index
    %29 = vector.load %arg4[%c0_14, %c0_15] : memref<128x128xf32, #tpu.memory_space<vmem>>, vector<128x128xf32>
    %cst_16 = arith.constant dense<0.000000e+00> : vector<8x128xf32>
    %30 = tpu.matmul %28, %29, %cst_16 {dimension_numbers = #tpu.dot_dimension_numbers<[1], [0], [0], [1], [0, 0, 1, 1], [], []>} : vector<8x128xf32>, vector<128x128xf32>, vector<8x128xf32> -> vector<8x128xf32>
    %cst_17 = arith.constant dense<0.000000e+00> : vector<128xf32>
    %31 = vector.multi_reduction <add>, %30, %cst_17 [0] : vector<8x128xf32> to vector<128xf32>
    %32 = vector.shape_cast %31 : vector<128xf32> to vector<1x128xf32>
    %cst_18 = arith.constant 8.000000e+00 : f32
    %33 = vector.broadcast %cst_18 : f32 to vector<1x128xf32>
    %34 = arith.divf %32, %33 : vector<1x128xf32>
    %35 = vector.broadcast %34 : vector<1x128xf32> to vector<8x128xf32>
    %36 = arith.subf %30, %35 : vector<8x128xf32>
    %37 = arith.mulf %36, %36 : vector<8x128xf32>
    %cst_19 = arith.constant dense<0.000000e+00> : vector<128xf32>
    %38 = vector.multi_reduction <add>, %37, %cst_19 [0] : vector<8x128xf32> to vector<128xf32>
    %39 = vector.shape_cast %38 : vector<128xf32> to vector<1x128xf32>
    %cst_20 = arith.constant 8.000000e+00 : f32
    %40 = vector.broadcast %cst_20 : f32 to vector<1x128xf32>
    %41 = arith.divf %39, %40 : vector<1x128xf32>
    %c0_21 = arith.constant 0 : index
    %c0_22 = arith.constant 0 : index
    %42 = vector.load %arg5[%c0_21, %c0_22] : memref<1x128xf32, #tpu.memory_space<vmem>>, vector<1x128xf32>
    %cst_23 = arith.constant 9.99999974E-6 : f32
    %43 = vector.broadcast %cst_23 : f32 to vector<1x128xf32>
    %44 = arith.addf %41, %43 : vector<1x128xf32>
    %45 = math.rsqrt %44 : vector<1x128xf32>
    %46 = arith.mulf %42, %45 : vector<1x128xf32>
    %47 = vector.broadcast %46 : vector<1x128xf32> to vector<8x128xf32>
    %48 = arith.mulf %36, %47 : vector<8x128xf32>
    %c0_24 = arith.constant 0 : index
    %c0_25 = arith.constant 0 : index
    %49 = vector.load %arg6[%c0_24, %c0_25] : memref<1x128xf32, #tpu.memory_space<vmem>>, vector<1x128xf32>
    %50 = vector.broadcast %49 : vector<1x128xf32> to vector<8x128xf32>
    %51 = arith.addf %48, %50 : vector<8x128xf32>
    %cst_26 = arith.constant 0.000000e+00 : f32
    %52 = vector.broadcast %cst_26 : f32 to vector<8x128xf32>
    %53 = arith.cmpf oge, %51, %52 : vector<8x128xf32>
    %cst_27 = arith.constant 0.00999999977 : f32
    %54 = vector.broadcast %cst_27 : f32 to vector<8x128xf32>
    %55 = arith.mulf %54, %51 : vector<8x128xf32>
    %56 = arith.select %53, %51, %55 : vector<8x128xi1>, vector<8x128xf32>
    %c0_28 = arith.constant 0 : index
    %c0_29 = arith.constant 0 : index
    %57 = vector.load %arg7[%c0_28, %c0_29] : memref<128x128xf32, #tpu.memory_space<vmem>>, vector<128x128xf32>
    %cst_30 = arith.constant dense<0.000000e+00> : vector<8x128xf32>
    %58 = tpu.matmul %56, %57, %cst_30 {dimension_numbers = #tpu.dot_dimension_numbers<[1], [0], [0], [1], [0, 0, 1, 1], [], []>} : vector<8x128xf32>, vector<128x128xf32>, vector<8x128xf32> -> vector<8x128xf32>
    %cst_31 = arith.constant dense<0.000000e+00> : vector<128xf32>
    %59 = vector.multi_reduction <add>, %58, %cst_31 [0] : vector<8x128xf32> to vector<128xf32>
    %60 = vector.shape_cast %59 : vector<128xf32> to vector<1x128xf32>
    %cst_32 = arith.constant 8.000000e+00 : f32
    %61 = vector.broadcast %cst_32 : f32 to vector<1x128xf32>
    %62 = arith.divf %60, %61 : vector<1x128xf32>
    %63 = vector.broadcast %62 : vector<1x128xf32> to vector<8x128xf32>
    %64 = arith.subf %58, %63 : vector<8x128xf32>
    %65 = arith.mulf %64, %64 : vector<8x128xf32>
    %cst_33 = arith.constant dense<0.000000e+00> : vector<128xf32>
    %66 = vector.multi_reduction <add>, %65, %cst_33 [0] : vector<8x128xf32> to vector<128xf32>
    %67 = vector.shape_cast %66 : vector<128xf32> to vector<1x128xf32>
    %cst_34 = arith.constant 8.000000e+00 : f32
    %68 = vector.broadcast %cst_34 : f32 to vector<1x128xf32>
    %69 = arith.divf %67, %68 : vector<1x128xf32>
    %c0_35 = arith.constant 0 : index
    %c0_36 = arith.constant 0 : index
    %70 = vector.load %arg8[%c0_35, %c0_36] : memref<1x128xf32, #tpu.memory_space<vmem>>, vector<1x128xf32>
    %cst_37 = arith.constant 9.99999974E-6 : f32
    %71 = vector.broadcast %cst_37 : f32 to vector<1x128xf32>
    %72 = arith.addf %69, %71 : vector<1x128xf32>
    %73 = math.rsqrt %72 : vector<1x128xf32>
    %74 = arith.mulf %70, %73 : vector<1x128xf32>
    %75 = vector.broadcast %74 : vector<1x128xf32> to vector<8x128xf32>
    %76 = arith.mulf %64, %75 : vector<8x128xf32>
    %c0_38 = arith.constant 0 : index
    %c0_39 = arith.constant 0 : index
    %77 = vector.load %arg9[%c0_38, %c0_39] : memref<1x128xf32, #tpu.memory_space<vmem>>, vector<1x128xf32>
    %78 = vector.broadcast %77 : vector<1x128xf32> to vector<8x128xf32>
    %79 = arith.addf %76, %78 : vector<8x128xf32>
    %cst_40 = arith.constant 0.000000e+00 : f32
    %80 = vector.broadcast %cst_40 : f32 to vector<8x128xf32>
    %81 = arith.cmpf oge, %79, %80 : vector<8x128xf32>
    %cst_41 = arith.constant 0.00999999977 : f32
    %82 = vector.broadcast %cst_41 : f32 to vector<8x128xf32>
    %83 = arith.mulf %82, %79 : vector<8x128xf32>
    %84 = arith.select %81, %79, %83 : vector<8x128xi1>, vector<8x128xf32>
    %c0_42 = arith.constant 0 : index
    %c0_43 = arith.constant 0 : index
    %85 = vector.load %arg10[%c0_42, %c0_43] : memref<128x128xf32, #tpu.memory_space<vmem>>, vector<128x128xf32>
    %cst_44 = arith.constant dense<0.000000e+00> : vector<8x128xf32>
    %86 = tpu.matmul %84, %85, %cst_44 {dimension_numbers = #tpu.dot_dimension_numbers<[1], [0], [0], [1], [0, 0, 1, 1], [], []>} : vector<8x128xf32>, vector<128x128xf32>, vector<8x128xf32> -> vector<8x128xf32>
    %cst_45 = arith.constant dense<0.000000e+00> : vector<128xf32>
    %87 = vector.multi_reduction <add>, %86, %cst_45 [0] : vector<8x128xf32> to vector<128xf32>
    %88 = vector.shape_cast %87 : vector<128xf32> to vector<1x128xf32>
    %cst_46 = arith.constant 8.000000e+00 : f32
    %89 = vector.broadcast %cst_46 : f32 to vector<1x128xf32>
    %90 = arith.divf %88, %89 : vector<1x128xf32>
    %91 = vector.broadcast %90 : vector<1x128xf32> to vector<8x128xf32>
    %92 = arith.subf %86, %91 : vector<8x128xf32>
    %93 = arith.mulf %92, %92 : vector<8x128xf32>
    %cst_47 = arith.constant dense<0.000000e+00> : vector<128xf32>
    %94 = vector.multi_reduction <add>, %93, %cst_47 [0] : vector<8x128xf32> to vector<128xf32>
    %95 = vector.shape_cast %94 : vector<128xf32> to vector<1x128xf32>
    %cst_48 = arith.constant 8.000000e+00 : f32
    %96 = vector.broadcast %cst_48 : f32 to vector<1x128xf32>
    %97 = arith.divf %95, %96 : vector<1x128xf32>
    %c0_49 = arith.constant 0 : index
    %c0_50 = arith.constant 0 : index
    %98 = vector.load %arg11[%c0_49, %c0_50] : memref<1x128xf32, #tpu.memory_space<vmem>>, vector<1x128xf32>
    %cst_51 = arith.constant 9.99999974E-6 : f32
    %99 = vector.broadcast %cst_51 : f32 to vector<1x128xf32>
    %100 = arith.addf %97, %99 : vector<1x128xf32>
    %101 = math.rsqrt %100 : vector<1x128xf32>
    %102 = arith.mulf %98, %101 : vector<1x128xf32>
    %103 = vector.broadcast %102 : vector<1x128xf32> to vector<8x128xf32>
    %104 = arith.mulf %92, %103 : vector<8x128xf32>
    %c0_52 = arith.constant 0 : index
    %c0_53 = arith.constant 0 : index
    %105 = vector.load %arg12[%c0_52, %c0_53] : memref<1x128xf32, #tpu.memory_space<vmem>>, vector<1x128xf32>
    %106 = vector.broadcast %105 : vector<1x128xf32> to vector<8x128xf32>
    %107 = arith.addf %104, %106 : vector<8x128xf32>
    %108 = arith.negf %107 : vector<8x128xf32>
    %109 = math.exp %108 : vector<8x128xf32>
    %cst_54 = arith.constant 1.000000e+00 : f32
    %110 = vector.broadcast %cst_54 : f32 to vector<8x128xf32>
    %111 = arith.addf %110, %109 : vector<8x128xf32>
    %112 = arith.divf %110, %111 : vector<8x128xf32>
    %c0_55 = arith.constant 0 : index
    %c0_56 = arith.constant 0 : index
    %113 = vector.load %arg13[%c0_55, %c0_56] : memref<8x128xf32, #tpu.memory_space<vmem>>, vector<8x128xf32>
    tpu.vector_store %arg13[%c0_55, %c0_56], %112 {strides = array<i32>} : memref<8x128xf32, #tpu.memory_space<vmem>>, vector<8x128xf32>,
    return
  }
}

</mosaic_0001>

<llo_original>
// kernel: tpu_custom_call.1
$region0: #{tpu_custom_call.1}
  #allocation0 [shape = 'u32[]', space=smem, size = 0x4, offset = 0x4, fixed_abs, tag = 'smem constant byte address 0x4 - core index']
  #allocation1 [shape = 'u32[144,128]{1,0:T(1,128)}', space=vmem, size = 0x12000, scoped, tag = 'internal scratch']
  %s0 = inlined_call_operand.hbm [shape: f32[8,128], index: 0, kind: input, shape index: {}]
  %s1 = inlined_call_operand.hbm [shape: f32[128,128], index: 1, kind: input, shape index: {}]
  %s2 = inlined_call_operand.vmem [shape: f32[1,128], index: 2, kind: input, shape index: {}]
  %s3 = inlined_call_operand.vmem [shape: f32[1,128], index: 3, kind: input, shape index: {}]
  %s4 = inlined_call_operand.hbm [shape: f32[128,128], index: 4, kind: input, shape index: {}]
  %s5 = inlined_call_operand.vmem [shape: f32[1,128], index: 5, kind: input, shape index: {}]
  %s6 = inlined_call_operand.vmem [shape: f32[1,128], index: 6, kind: input, shape index: {}]
  %s7 = inlined_call_operand.hbm [shape: f32[128,128], index: 7, kind: input, shape index: {}]
  %s8 = inlined_call_operand.vmem [shape: f32[1,128], index: 8, kind: input, shape index: {}]
  %s9 = inlined_call_operand.vmem [shape: f32[1,128], index: 9, kind: input, shape index: {}]
  %s10 = inlined_call_operand.hbm [shape: f32[128,128], index: 10, kind: input, shape index: {}]
  %s11 = inlined_call_operand.vmem [shape: f32[1,128], index: 11, kind: input, shape index: {}]
  %s12 = inlined_call_operand.vmem [shape: f32[1,128], index: 12, kind: input, shape index: {}]
  %s13 = inlined_call_operand.hbm [shape: f32[8,128], index: 13, kind: output, shape index: {}]
  %s14 = sld [smem:[#allocation0]]
  $region82: #{tpu_custom_call.1} parent=0
    _
  %s16 = ssub.s32 1, %s14
  %s17 = scalar_select 0, %s16, %s14
  $region1: #{tpu_custom_call.1} parent=0
    #allocation2 [shape = 'u8[4096]{0}', space=vmem, size = 0x1000, scoped, tag = 'input window, operand 0, single buffered']
    #allocation3 [shape = 's32[1]{0}', space=sflag, size = 0x4, scoped, tag = 'scoped memory for tpu_custom_call.1']
    #allocation4 [shape = 's32[1]{0}', space=sflag, size = 0x4, scoped, tag = 'scoped memory for tpu_custom_call.1']
    #allocation5 [shape = 'u8[65536]{0}', space=vmem, size = 0x10000, scoped, tag = 'input window, operand 1, single buffered']
    #allocation6 [shape = 's32[1]{0}', space=sflag, size = 0x4, scoped, tag = 'scoped memory for tpu_custom_call.1']
    #allocation7 [shape = 'u8[65536]{0}', space=vmem, size = 0x10000, scoped, tag = 'input window, operand 4, single buffered']
    #allocation8 [shape = 'u8[65536]{0}', space=vmem, size = 0x10000, scoped, tag = 'input window, operand 7, single buffered']
    #allocation9 [shape = 's32[1]{0}', space=sflag, size = 0x4, scoped, tag = 'scoped memory for tpu_custom_call.1']
    #allocation10 [shape = 'u8[65536]{0}', space=vmem, size = 0x10000, scoped, tag = 'input window, operand 10, single buffered']
    #allocation11 [shape = 'u8[4096]{0}', space=vmem, size = 0x1000, scoped, tag = 'output window, operand 0, single buffered']
    %18 = vsyncpa [#allocation3], 0
    %19 = vsyncpa [#allocation6], 0
    %20 = vsyncpa [#allocation9], 0
    %21 = vsyncpa [#allocation4], 0
    // Predicated region
    $region2: #{tpu_custom_call.1} parent=1 // pred_check
      _
    $region3: #{tpu_custom_call.1} parent=1 // pred_check_branch
      %23 = sbr.rel (0) target = $region5
    $region4: #{tpu_custom_call.1} parent=1 // pred_region
      %s25 = ssub.s32 128, 128
      %26 = vsyncadd [#allocation3], %s25
      %s28 = sshll.u32 [#allocation2], 4
      %s29 = int_to_ptr.vmem [resolvable:$true] %s28
      %31 = dma.hbm_to_vmem [thread:$0]  %s0, 128, %s29, [#allocation3]
    $region5: #{tpu_custom_call.1} parent=1 // pred_fallthru
      _
    // Predicated region
    $region6: #{tpu_custom_call.1} parent=1 // pred_check
      _
    $region7: #{tpu_custom_call.1} parent=1 // pred_check_branch
      %33 = sbr.rel (0) target = $region9
    $region8: #{tpu_custom_call.1} parent=1 // pred_region
      %s35 = ssub.s32 2048, 2048
      %36 = vsyncadd [#allocation6], %s35
      %s37 = sshll.u32 [#allocation5], 4
      %s38 = int_to_ptr.vmem [resolvable:$true] %s37
      %43 = dma.hbm_to_vmem [thread:$0]  %s1, 2048, %s38, [#allocation6], 128, 128, 8
    $region9: #{tpu_custom_call.1} parent=1 // pred_fallthru
      _
    // Predicated region
    $region10: #{tpu_custom_call.1} parent=1 // pred_check
      _
    $region11: #{tpu_custom_call.1} parent=1 // pred_check_branch
      %45 = sbr.rel (0) target = $region13
    $region12: #{tpu_custom_call.1} parent=1 // pred_region
      _
    $region13: #{tpu_custom_call.1} parent=1 // pred_fallthru
      _
    // Predicated region
    $region14: #{tpu_custom_call.1} parent=1 // pred_check
      _
    $region15: #{tpu_custom_call.1} parent=1 // pred_check_branch
      %47 = sbr.rel (0) target = $region17
    $region16: #{tpu_custom_call.1} parent=1 // pred_region
      _
    $region17: #{tpu_custom_call.1} parent=1 // pred_fallthru
      _
    // Predicated region
    $region18: #{tpu_custom_call.1} parent=1 // pred_check
      _
    $region19: #{tpu_custom_call.1} parent=1 // pred_check_branch
      %49 = sbr.rel (0) target = $region21
    $region20: #{tpu_custom_call.1} parent=1 // pred_region
      %s51 = ssub.s32 2048, 2048
      %52 = vsyncadd [#allocation6], %s51
      %s53 = sshll.u32 [#allocation7], 4
      %s54 = int_to_ptr.vmem [resolvable:$true] %s53
      %59 = dma.hbm_to_vmem [thread:$0]  %s4, 2048, %s54, [#allocation6], 128, 128, 8
    $region21: #{tpu_custom_call.1} parent=1 // pred_fallthru
      _
    // Predicated region
    $region22: #{tpu_custom_call.1} parent=1 // pred_check
      _
    $region23: #{tpu_custom_call.1} parent=1 // pred_check_branch
      %61 = sbr.rel (0) target = $region25
    $region24: #{tpu_custom_call.1} parent=1 // pred_region
      _
    $region25: #{tpu_custom_call.1} parent=1 // pred_fallthru
      _
    // Predicated region
    $region26: #{tpu_custom_call.1} parent=1 // pred_check
      _
    $region27: #{tpu_custom_call.1} parent=1 // pred_check_branch
      %63 = sbr.rel (0) target = $region29
    $region28: #{tpu_custom_call.1} parent=1 // pred_region
      _
    $region29: #{tpu_custom_call.1} parent=1 // pred_fallthru
      _
    // Predicated region
    $region30: #{tpu_custom_call.1} parent=1 // pred_check
      _
    $region31: #{tpu_custom_call.1} parent=1 // pred_check_branch
      %65 = sbr.rel (0) target = $region33
    $region32: #{tpu_custom_call.1} parent=1 // pred_region
      %s67 = ssub.s32 2048, 2048
      %68 = vsyncadd [#allocation9], %s67
      %s69 = sshll.u32 [#allocation8], 4
      %s70 = int_to_ptr.vmem [resolvable:$true] %s69
      %75 = dma.hbm_to_vmem [thread:$0]  %s7, 2048, %s70, [#allocation9], 128, 128, 8
    $region33: #{tpu_custom_call.1} parent=1 // pred_fallthru
      _
    // Predicated region
    $region34: #{tpu_custom_call.1} parent=1 // pred_check
      _
    $region35: #{tpu_custom_call.1} parent=1 // pred_check_branch
      %77 = sbr.rel (0) target = $region37
    $region36: #{tpu_custom_call.1} parent=1 // pred_region
      _
    $region37: #{tpu_custom_call.1} parent=1 // pred_fallthru
      _
    // Predicated region
    $region38: #{tpu_custom_call.1} parent=1 // pred_check
      _
    $region39: #{tpu_custom_call.1} parent=1 // pred_check_branch
      %79 = sbr.rel (0) target = $region41
    $region40: #{tpu_custom_call.1} parent=1 // pred_region
      _
    $region41: #{tpu_custom_call.1} parent=1 // pred_fallthru
      _
    // Predicated region
    $region42: #{tpu_custom_call.1} parent=1 // pred_check
      _
    $region43: #{tpu_custom_call.1} parent=1 // pred_check_branch
      %81 = sbr.rel (0) target = $region45
    $region44: #{tpu_custom_call.1} parent=1 // pred_region
      %s83 = ssub.s32 2048, 2048
      %84 = vsyncadd [#allocation9], %s83
      %s85 = sshll.u32 [#allocation10], 4
      %s86 = int_to_ptr.vmem [resolvable:$true] %s85
      %91 = dma.hbm_to_vmem [thread:$0]  %s10, 2048, %s86, [#allocation9], 128, 128, 8
    $region45: #{tpu_custom_call.1} parent=1 // pred_fallthru
      _
    // Predicated region
    $region46: #{tpu_custom_call.1} parent=1 // pred_check
      _
    $region47: #{tpu_custom_call.1} parent=1 // pred_check_branch
      %93 = sbr.rel (0) target = $region49
    $region48: #{tpu_custom_call.1} parent=1 // pred_region
      _
    $region49: #{tpu_custom_call.1} parent=1 // pred_fallthru
      _
    // Predicated region
    $region50: #{tpu_custom_call.1} parent=1 // pred_check
      _
    $region51: #{tpu_custom_call.1} parent=1 // pred_check_branch
      %95 = sbr.rel (0) target = $region53
    $region52: #{tpu_custom_call.1} parent=1 // pred_region
      _
    $region53: #{tpu_custom_call.1} parent=1 // pred_fallthru
      _
    // Predicated region
    $region54: #{tpu_custom_call.1} parent=1 // pred_check
      _
    $region55: #{tpu_custom_call.1} parent=1 // pred_check_branch
      %97 = sbr.rel (0) target = $region57
    $region56: #{tpu_custom_call.1} parent=1 // pred_region
      %98 = dma.done [#allocation3], 128
    $region57: #{tpu_custom_call.1} parent=1 // pred_fallthru
      _
    // Predicated region
    $region58: #{tpu_custom_call.1} parent=1 // pred_check
      _
    $region59: #{tpu_custom_call.1} parent=1 // pred_check_branch
      %100 = sbr.rel (0) target = $region61
    $region60: #{tpu_custom_call.1} parent=1 // pred_region
      %101 = dma.done [#allocation6], 2048
    $region61: #{tpu_custom_call.1} parent=1 // pred_fallthru
      _
    // Predicated region
    $region62: #{tpu_custom_call.1} parent=1 // pred_check
      _
    $region63: #{tpu_custom_call.1} parent=1 // pred_check_branch
      %103 = sbr.rel (0) target = $region65
    $region64: #{tpu_custom_call.1} parent=1 // pred_region
      %104 = dma.done [#allocation6], 2048
    $region65: #{tpu_custom_call.1} parent=1 // pred_fallthru
      _
    // Predicated region
    $region66: #{tpu_custom_call.1} parent=1 // pred_check
      _
    $region67: #{tpu_custom_call.1} parent=1 // pred_check_branch
      %106 = sbr.rel (0) target = $region69
    $region68: #{tpu_custom_call.1} parent=1 // pred_region
      %107 = dma.done [#allocation9], 2048
    $region69: #{tpu_custom_call.1} parent=1 // pred_fallthru
      _
    // Predicated region
    $region70: #{tpu_custom_call.1} parent=1 // pred_check
      _
    $region71: #{tpu_custom_call.1} parent=1 // pred_check_branch
      %109 = sbr.rel (0) target = $region73
    $region72: #{tpu_custom_call.1} parent=1 // pred_region
      %110 = dma.done [#allocation9], 2048
    $region73: #{tpu_custom_call.1} parent=1 // pred_fallthru
      _
    %v111 = vld [vmem:[#allocation2] sm:$0xff]
    %v112 = vld [vmem:[#allocation5] sm:$0xff]
    %v113 = vld [vmem:[#allocation5 + $0x8] sm:$0xff]
    %v114 = vld [vmem:[#allocation5 + $0x10] sm:$0xff]
    %v115 = vld [vmem:[#allocation5 + $0x18] sm:$0xff]
    %v116 = vld [vmem:[#allocation5 + $0x20] sm:$0xff]
    %v117 = vld [vmem:[#allocation5 + $0x28] sm:$0xff]
    %v118 = vld [vmem:[#allocation5 + $0x30] sm:$0xff]
    %v119 = vld [vmem:[#allocation5 + $0x38] sm:$0xff]
    %v120 = vld [vmem:[#allocation5 + $0x40] sm:$0xff]
    %v121 = vld [vmem:[#allocation5 + $0x48] sm:$0xff]
    %v122 = vld [vmem:[#allocation5 + $0x50] sm:$0xff]
    %v123 = vld [vmem:[#allocation5 + $0x58] sm:$0xff]
    %v124 = vld [vmem:[#allocation5 + $0x60] sm:$0xff]
    %v125 = vld [vmem:[#allocation5 + $0x68] sm:$0xff]
    %v126 = vld [vmem:[#allocation5 + $0x70] sm:$0xff]
    %v127 = vld [vmem:[#allocation5 + $0x78] sm:$0xff]
    %128 = vmatprep.subr.mxu0 0.0
    %129 = vmatpush1.msra.mxu0 %v127
    %130 = vmatprep.subr.mxu0 0.0
    %131 = vmatpush1.msra.mxu0 %v126
    %132 = vmatprep.subr.mxu0 0.0
    %133 = vmatpush1.msra.mxu0 %v125
    %134 = vmatprep.subr.mxu0 0.0
    %135 = vmatpush1.msra.mxu0 %v124
    %136 = vmatprep.subr.mxu0 0.0
    %137 = vmatpush1.msra.mxu0 %v123
    %138 = vmatprep.subr.mxu0 0.0
    %139 = vmatpush1.msra.mxu0 %v122
    %140 = vmatprep.subr.mxu0 0.0
    %141 = vmatpush1.msra.mxu0 %v121
    %142 = vmatprep.subr.mxu0 0.0
    %143 = vmatpush1.msra.mxu0 %v120
    %144 = vmatprep.subr.mxu0 0.0
    %145 = vmatpush1.msra.mxu0 %v119
    %146 = vmatprep.subr.mxu0 0.0
    %147 = vmatpush1.msra.mxu0 %v118
    %148 = vmatprep.subr.mxu0 0.0
    %149 = vmatpush1.msra.mxu0 %v117
    %150 = vmatprep.subr.mxu0 0.0
    %151 = vmatpush1.msra.mxu0 %v116
    %152 = vmatprep.subr.mxu0 0.0
    %153 = vmatpush1.msra.mxu0 %v115
    %154 = vmatprep.subr.mxu0 0.0
    %155 = vmatpush1.msra.mxu0 %v114
    %156 = vmatprep.subr.mxu0 0.0
    %157 = vmatpush1.msra.mxu0 %v113
    %158 = vmatprep.subr.mxu0 0.0
    %159 = vmatpush1.msra.mxu0 %v112
    %160 = vmatprep.subr.mxu0 0.0
    %161 = vmatpush2.msra.mxu0 0.0
    %162 = vmatprep.subr.mxu0 0.0
    %163 = vmatpush2.msra.mxu0 0.0
    %164 = vmatprep.subr.mxu0 0.0
    %165 = vmatpush2.msra.mxu0 0.0
    %166 = vmatprep.subr.mxu0 0.0
    %167 = vmatpush2.msra.mxu0 0.0
    %168 = vmatprep.subr.mxu0 0.0
    %169 = vmatpush2.msra.mxu0 0.0
    %170 = vmatprep.subr.mxu0 0.0
    %171 = vmatpush2.msra.mxu0 0.0
    %172 = vmatprep.subr.mxu0 0.0
    %173 = vmatpush2.msra.mxu0 0.0
    %174 = vmatprep.subr.mxu0 0.0
    %175 = vmatpush2.msra.mxu0 0.0
    %176 = vmatprep.subr.mxu0 0.0
    %177 = vmatpush2.msra.mxu0 0.0
    %178 = vmatprep.subr.mxu0 0.0
    %179 = vmatpush2.msra.mxu0 0.0
    %180 = vmatprep.subr.mxu0 0.0
    %181 = vmatpush2.msra.mxu0 0.0
    %182 = vmatprep.subr.mxu0 0.0
    %183 = vmatpush2.msra.mxu0 0.0
    %184 = vmatprep.subr.mxu0 0.0
    %185 = vmatpush2.msra.mxu0 0.0
    %186 = vmatprep.subr.mxu0 0.0
    %187 = vmatpush2.msra.mxu0 0.0
    %188 = vmatprep.subr.mxu0 0.0
    %189 = vmatpush2.msra.mxu0 0.0
    %190 = vmatprep.subr.mxu0 0.0
    %191 = vmatpush2.msra.mxu0 0.0
    %192 = vmatprep.mubr.f32.mxu0 0.0
    %193 = vmatmul.mubr.f32.gmra.mxu0 %v111
    %v194 = vpop.f32.mrf.mxu0
    %v195 = vadd.f32 0.0, %v194
    %v196 = vpop.f32.mrf.mxu0
    %197 = vdwg.mxu0
    %v198 = vrot.slane %v195, 4
    %v199 = vadd.f32 %v195, %v198
    %v200 = vrot.slane %v199, 2
    %v201 = vadd.f32 %v199, %v200
    %v202 = vrot.slane %v201, 1
    %v203 = vadd.f32 %v201, %v202
    %v204 = vrcp.pop 8.0
    %v205 = vmul.f32 %v203, %v204
    %v206 = vsub.f32 %v195, %v205
    %v207 = vmul.f32 %v206, %v206
    %v208 = vrot.slane %v207, 4
    %v209 = vadd.f32 %v207, %v208
    %v210 = vrot.slane %v209, 2
    %v211 = vadd.f32 %v209, %v210
    %v212 = vrot.slane %v211, 1
    %v213 = vadd.f32 %v211, %v212
    %v214 = vmul.f32 %v213, %v204
    %v215 = vld [vmem:[%s2] sm:$0x1]
    %v216 = vadd.f32 %v214, 1e-05
    %v217 = vrsqrt.pop %v216
    %v218 = vmul.f32 %v215, %v217
    %v220 = vlaneseq
    %v221 = vshrl.u32 %v220, 7
    %v222 = vsub.s32 0, %v221
    %v223 = vrot.slane %v218, %v222
    %v225 = vmul.f32 %v206, %v223
    %v226 = vld [vmem:[%s3] sm:$0x1]
    %v228 = vlaneseq
    %v229 = vshrl.u32 %v228, 7
    %v230 = vsub.s32 0, %v229
    %v231 = vrot.slane %v226, %v230
    %v233 = vadd.f32 %v225, %v231
    %vm234 = vcmp.ge.f32.partialorder %v233, 0.0
    %v235 = vmul.f32 %v233, 0.01
    %v236 = vsel %vm234, %v233, %v235
    %v237 = vld [vmem:[#allocation7] sm:$0xff]
    %v238 = vld [vmem:[#allocation7 + $0x8] sm:$0xff]
    %v239 = vld [vmem:[#allocation7 + $0x10] sm:$0xff]
    %v240 = vld [vmem:[#allocation7 + $0x18] sm:$0xff]
    %v241 = vld [vmem:[#allocation7 + $0x20] sm:$0xff]
    %v242 = vld [vmem:[#allocation7 + $0x28] sm:$0xff]
    %v243 = vld [vmem:[#allocation7 + $0x30] sm:$0xff]
    %v244 = vld [vmem:[#allocation7 + $0x38] sm:$0xff]
    %v245 = vld [vmem:[#allocation7 + $0x40] sm:$0xff]
    %v246 = vld [vmem:[#allocation7 + $0x48] sm:$0xff]
    %v247 = vld [vmem:[#allocation7 + $0x50] sm:$0xff]
    %v248 = vld [vmem:[#allocation7 + $0x58] sm:$0xff]
    %v249 = vld [vmem:[#allocation7 + $0x60] sm:$0xff]
    %v250 = vld [vmem:[#allocation7 + $0x68] sm:$0xff]
    %v251 = vld [vmem:[#allocation7 + $0x70] sm:$0xff]
    %v252 = vld [vmem:[#allocation7 + $0x78] sm:$0xff]
    %253 = vmatprep.subr.mxu0 0.0
    %254 = vmatpush1.msra.mxu0 %v252
    %255 = vmatprep.subr.mxu0 0.0
    %256 = vmatpush1.msra.mxu0 %v251
    %257 = vmatprep.subr.mxu0 0.0
    %258 = vmatpush1.msra.mxu0 %v250
    %259 = vmatprep.subr.mxu0 0.0
    %260 = vmatpush1.msra.mxu0 %v249
    %261 = vmatprep.subr.mxu0 0.0
    %262 = vmatpush1.msra.mxu0 %v248
    %263 = vmatprep.subr.mxu0 0.0
    %264 = vmatpush1.msra.mxu0 %v247
    %265 = vmatprep.subr.mxu0 0.0
    %266 = vmatpush1.msra.mxu0 %v246
    %267 = vmatprep.subr.mxu0 0.0
    %268 = vmatpush1.msra.mxu0 %v245
    %269 = vmatprep.subr.mxu0 0.0
    %270 = vmatpush1.msra.mxu0 %v244
    %271 = vmatprep.subr.mxu0 0.0
    %272 = vmatpush1.msra.mxu0 %v243
    %273 = vmatprep.subr.mxu0 0.0
    %274 = vmatpush1.msra.mxu0 %v242
    %275 = vmatprep.subr.mxu0 0.0
    %276 = vmatpush1.msra.mxu0 %v241
    %277 = vmatprep.subr.mxu0 0.0
    %278 = vmatpush1.msra.mxu0 %v240
    %279 = vmatprep.subr.mxu0 0.0
    %280 = vmatpush1.msra.mxu0 %v239
    %281 = vmatprep.subr.mxu0 0.0
    %282 = vmatpush1.msra.mxu0 %v238
    %283 = vmatprep.subr.mxu0 0.0
    %284 = vmatpush1.msra.mxu0 %v237
    %285 = vmatprep.subr.mxu0 0.0
    %286 = vmatpush2.msra.mxu0 0.0
    %287 = vmatprep.subr.mxu0 0.0
    %288 = vmatpush2.msra.mxu0 0.0
    %289 = vmatprep.subr.mxu0 0.0
    %290 = vmatpush2.msra.mxu0 0.0
    %291 = vmatprep.subr.mxu0 0.0
    %292 = vmatpush2.msra.mxu0 0.0
    %293 = vmatprep.subr.mxu0 0.0
    %294 = vmatpush2.msra.mxu0 0.0
    %295 = vmatprep.subr.mxu0 0.0
    %296 = vmatpush2.msra.mxu0 0.0
    %297 = vmatprep.subr.mxu0 0.0
    %298 = vmatpush2.msra.mxu0 0.0
    %299 = vmatprep.subr.mxu0 0.0
    %300 = vmatpush2.msra.mxu0 0.0
    %301 = vmatprep.subr.mxu0 0.0
    %302 = vmatpush2.msra.mxu0 0.0
    %303 = vmatprep.subr.mxu0 0.0
    %304 = vmatpush2.msra.mxu0 0.0
    %305 = vmatprep.subr.mxu0 0.0
    %306 = vmatpush2.msra.mxu0 0.0
    %307 = vmatprep.subr.mxu0 0.0
    %308 = vmatpush2.msra.mxu0 0.0
    %309 = vmatprep.subr.mxu0 0.0
    %310 = vmatpush2.msra.mxu0 0.0
    %311 = vmatprep.subr.mxu0 0.0
    %312 = vmatpush2.msra.mxu0 0.0
    %313 = vmatprep.subr.mxu0 0.0
    %314 = vmatpush2.msra.mxu0 0.0
    %315 = vmatprep.subr.mxu0 0.0
    %316 = vmatpush2.msra.mxu0 0.0
    %317 = vmatprep.mubr.f32.mxu0 0.0
    %318 = vmatmul.mubr.f32.gmra.mxu0 %v236
    %v319 = vpop.f32.mrf.mxu0
    %v320 = vadd.f32 0.0, %v319
    %v321 = vpop.f32.mrf.mxu0
    %322 = vdwg.mxu0
    %v323 = vrot.slane %v320, 4
    %v324 = vadd.f32 %v320, %v323
    %v325 = vrot.slane %v324, 2
    %v326 = vadd.f32 %v324, %v325
    %v327 = vrot.slane %v326, 1
    %v328 = vadd.f32 %v326, %v327
    %v329 = vmul.f32 %v328, %v204
    %v330 = vsub.f32 %v320, %v329
    %v331 = vmul.f32 %v330, %v330
    %v332 = vrot.slane %v331, 4
    %v333 = vadd.f32 %v331, %v332
    %v334 = vrot.slane %v333, 2
    %v335 = vadd.f32 %v333, %v334
    %v336 = vrot.slane %v335, 1
    %v337 = vadd.f32 %v335, %v336
    %v338 = vmul.f32 %v337, %v204
    %v339 = vld [vmem:[%s5] sm:$0x1]
    %v340 = vadd.f32 %v338, 1e-05
    %v341 = vrsqrt.pop %v340
    %v342 = vmul.f32 %v339, %v341
    %v344 = vlaneseq
    %v345 = vshrl.u32 %v344, 7
    %v346 = vsub.s32 0, %v345
    %v347 = vrot.slane %v342, %v346
    %v349 = vmul.f32 %v330, %v347
    %v350 = vld [vmem:[%s6] sm:$0x1]
    %v352 = vlaneseq
    %v353 = vshrl.u32 %v352, 7
    %v354 = vsub.s32 0, %v353
    %v355 = vrot.slane %v350, %v354
    %v357 = vadd.f32 %v349, %v355
    %vm358 = vcmp.ge.f32.partialorder %v357, 0.0
    %v359 = vmul.f32 %v357, 0.01
    %v360 = vsel %vm358, %v357, %v359
    %v361 = vld [vmem:[#allocation8] sm:$0xff]
    %v362 = vld [vmem:[#allocation8 + $0x8] sm:$0xff]
    %v363 = vld [vmem:[#allocation8 + $0x10] sm:$0xff]
    %v364 = vld [vmem:[#allocation8 + $0x18] sm:$0xff]
    %v365 = vld [vmem:[#allocation8 + $0x20] sm:$0xff]
    %v366 = vld [vmem:[#allocation8 + $0x28] sm:$0xff]
    %v367 = vld [vmem:[#allocation8 + $0x30] sm:$0xff]
    %v368 = vld [vmem:[#allocation8 + $0x38] sm:$0xff]
    %v369 = vld [vmem:[#allocation8 + $0x40] sm:$0xff]
    %v370 = vld [vmem:[#allocation8 + $0x48] sm:$0xff]
    %v371 = vld [vmem:[#allocation8 + $0x50] sm:$0xff]
    %v372 = vld [vmem:[#allocation8 + $0x58] sm:$0xff]
    %v373 = vld [vmem:[#allocation8 + $0x60] sm:$0xff]
    %v374 = vld [vmem:[#allocation8 + $0x68] sm:$0xff]
    %v375 = vld [vmem:[#allocation8 + $0x70] sm:$0xff]
    %v376 = vld [vmem:[#allocation8 + $0x78] sm:$0xff]
    %377 = vmatprep.subr.mxu0 0.0
    %378 = vmatpush1.msra.mxu0 %v376
    %379 = vmatprep.subr.mxu0 0.0
    %380 = vmatpush1.msra.mxu0 %v375
    %381 = vmatprep.subr.mxu0 0.0
    %382 = vmatpush1.msra.mxu0 %v374
    %383 = vmatprep.subr.mxu0 0.0
    %384 = vmatpush1.msra.mxu0 %v373
    %385 = vmatprep.subr.mxu0 0.0
    %386 = vmatpush1.msra.mxu0 %v372
    %387 = vmatprep.subr.mxu0 0.0
    %388 = vmatpush1.msra.mxu0 %v371
    %389 = vmatprep.subr.mxu0 0.0
    %390 = vmatpush1.msra.mxu0 %v370
    %391 = vmatprep.subr.mxu0 0.0
    %392 = vmatpush1.msra.mxu0 %v369
    %393 = vmatprep.subr.mxu0 0.0
    %394 = vmatpush1.msra.mxu0 %v368
    %395 = vmatprep.subr.mxu0 0.0
    %396 = vmatpush1.msra.mxu0 %v367
    %397 = vmatprep.subr.mxu0 0.0
    %398 = vmatpush1.msra.mxu0 %v366
    %399 = vmatprep.subr.mxu0 0.0
    %400 = vmatpush1.msra.mxu0 %v365
    %401 = vmatprep.subr.mxu0 0.0
    %402 = vmatpush1.msra.mxu0 %v364
    %403 = vmatprep.subr.mxu0 0.0
    %404 = vmatpush1.msra.mxu0 %v363
    %405 = vmatprep.subr.mxu0 0.0
    %406 = vmatpush1.msra.mxu0 %v362
    %407 = vmatprep.subr.mxu0 0.0
    %408 = vmatpush1.msra.mxu0 %v361
    %409 = vmatprep.subr.mxu0 0.0
    %410 = vmatpush2.msra.mxu0 0.0
    %411 = vmatprep.subr.mxu0 0.0
    %412 = vmatpush2.msra.mxu0 0.0
    %413 = vmatprep.subr.mxu0 0.0
    %414 = vmatpush2.msra.mxu0 0.0
    %415 = vmatprep.subr.mxu0 0.0
    %416 = vmatpush2.msra.mxu0 0.0
    %417 = vmatprep.subr.mxu0 0.0
    %418 = vmatpush2.msra.mxu0 0.0
    %419 = vmatprep.subr.mxu0 0.0
    %420 = vmatpush2.msra.mxu0 0.0
    %421 = vmatprep.subr.mxu0 0.0
    %422 = vmatpush2.msra.mxu0 0.0
    %423 = vmatprep.subr.mxu0 0.0
    %424 = vmatpush2.msra.mxu0 0.0
    %425 = vmatprep.subr.mxu0 0.0
    %426 = vmatpush2.msra.mxu0 0.0
    %427 = vmatprep.subr.mxu0 0.0
    %428 = vmatpush2.msra.mxu0 0.0
    %429 = vmatprep.subr.mxu0 0.0
    %430 = vmatpush2.msra.mxu0 0.0
    %431 = vmatprep.subr.mxu0 0.0
    %432 = vmatpush2.msra.mxu0 0.0
    %433 = vmatprep.subr.mxu0 0.0
    %434 = vmatpush2.msra.mxu0 0.0
    %435 = vmatprep.subr.mxu0 0.0
    %436 = vmatpush2.msra.mxu0 0.0
    %437 = vmatprep.subr.mxu0 0.0
    %438 = vmatpush2.msra.mxu0 0.0
    %439 = vmatprep.subr.mxu0 0.0
    %440 = vmatpush2.msra.mxu0 0.0
    %441 = vmatprep.mubr.f32.mxu0 0.0
    %442 = vmatmul.mubr.f32.gmra.mxu0 %v360
    %v443 = vpop.f32.mrf.mxu0
    %v444 = vadd.f32 0.0, %v443
    %v445 = vpop.f32.mrf.mxu0
    %446 = vdwg.mxu0
    %v447 = vrot.slane %v444, 4
    %v448 = vadd.f32 %v444, %v447
    %v449 = vrot.slane %v448, 2
    %v450 = vadd.f32 %v448, %v449
    %v451 = vrot.slane %v450, 1
    %v452 = vadd.f32 %v450, %v451
    %v453 = vmul.f32 %v452, %v204
    %v454 = vsub.f32 %v444, %v453
    %v455 = vmul.f32 %v454, %v454
    %v456 = vrot.slane %v455, 4
    %v457 = vadd.f32 %v455, %v456
    %v458 = vrot.slane %v457, 2
    %v459 = vadd.f32 %v457, %v458
    %v460 = vrot.slane %v459, 1
    %v461 = vadd.f32 %v459, %v460
    %v462 = vmul.f32 %v461, %v204
    %v463 = vld [vmem:[%s8] sm:$0x1]
    %v464 = vadd.f32 %v462, 1e-05
    %v465 = vrsqrt.pop %v464
    %v466 = vmul.f32 %v463, %v465
    %v468 = vlaneseq
    %v469 = vshrl.u32 %v468, 7
    %v470 = vsub.s32 0, %v469
    %v471 = vrot.slane %v466, %v470
    %v473 = vmul.f32 %v454, %v471
    %v474 = vld [vmem:[%s9] sm:$0x1]
    %v476 = vlaneseq
    %v477 = vshrl.u32 %v476, 7
    %v478 = vsub.s32 0, %v477
    %v479 = vrot.slane %v474, %v478
    %v481 = vadd.f32 %v473, %v479
    %vm482 = vcmp.ge.f32.partialorder %v481, 0.0
    %v483 = vmul.f32 %v481, 0.01
    %v484 = vsel %vm482, %v481, %v483
    %v485 = vld [vmem:[#allocation10] sm:$0xff]
    %v486 = vld [vmem:[#allocation10 + $0x8] sm:$0xff]
    %v487 = vld [vmem:[#allocation10 + $0x10] sm:$0xff]
    %v488 = vld [vmem:[#allocation10 + $0x18] sm:$0xff]
    %v489 = vld [vmem:[#allocation10 + $0x20] sm:$0xff]
    %v490 = vld [vmem:[#allocation10 + $0x28] sm:$0xff]
    %v491 = vld [vmem:[#allocation10 + $0x30] sm:$0xff]
    %v492 = vld [vmem:[#allocation10 + $0x38] sm:$0xff]
    %v493 = vld [vmem:[#allocation10 + $0x40] sm:$0xff]
    %v494 = vld [vmem:[#allocation10 + $0x48] sm:$0xff]
    %v495 = vld [vmem:[#allocation10 + $0x50] sm:$0xff]
    %v496 = vld [vmem:[#allocation10 + $0x58] sm:$0xff]
    %v497 = vld [vmem:[#allocation10 + $0x60] sm:$0xff]
    %v498 = vld [vmem:[#allocation10 + $0x68] sm:$0xff]
    %v499 = vld [vmem:[#allocation10 + $0x70] sm:$0xff]
    %v500 = vld [vmem:[#allocation10 + $0x78] sm:$0xff]
    %501 = vmatprep.subr.mxu0 0.0
    %502 = vmatpush1.msra.mxu0 %v500
    %503 = vmatprep.subr.mxu0 0.0
    %504 = vmatpush1.msra.mxu0 %v499
    %505 = vmatprep.subr.mxu0 0.0
    %506 = vmatpush1.msra.mxu0 %v498
    %507 = vmatprep.subr.mxu0 0.0
    %508 = vmatpush1.msra.mxu0 %v497
    %509 = vmatprep.subr.mxu0 0.0
    %510 = vmatpush1.msra.mxu0 %v496
    %511 = vmatprep.subr.mxu0 0.0
    %512 = vmatpush1.msra.mxu0 %v495
    %513 = vmatprep.subr.mxu0 0.0
    %514 = vmatpush1.msra.mxu0 %v494
    %515 = vmatprep.subr.mxu0 0.0
    %516 = vmatpush1.msra.mxu0 %v493
    %517 = vmatprep.subr.mxu0 0.0
    %518 = vmatpush1.msra.mxu0 %v492
    %519 = vmatprep.subr.mxu0 0.0
    %520 = vmatpush1.msra.mxu0 %v491
    %521 = vmatprep.subr.mxu0 0.0
    %522 = vmatpush1.msra.mxu0 %v490
    %523 = vmatprep.subr.mxu0 0.0
    %524 = vmatpush1.msra.mxu0 %v489
    %525 = vmatprep.subr.mxu0 0.0
    %526 = vmatpush1.msra.mxu0 %v488
    %527 = vmatprep.subr.mxu0 0.0
    %528 = vmatpush1.msra.mxu0 %v487
    %529 = vmatprep.subr.mxu0 0.0
    %530 = vmatpush1.msra.mxu0 %v486
    %531 = vmatprep.subr.mxu0 0.0
    %532 = vmatpush1.msra.mxu0 %v485
    %533 = vmatprep.subr.mxu0 0.0
    %534 = vmatpush2.msra.mxu0 0.0
    %535 = vmatprep.subr.mxu0 0.0
    %536 = vmatpush2.msra.mxu0 0.0
    %537 = vmatprep.subr.mxu0 0.0
    %538 = vmatpush2.msra.mxu0 0.0
    %539 = vmatprep.subr.mxu0 0.0
    %540 = vmatpush2.msra.mxu0 0.0
    %541 = vmatprep.subr.mxu0 0.0
    %542 = vmatpush2.msra.mxu0 0.0
    %543 = vmatprep.subr.mxu0 0.0
    %544 = vmatpush2.msra.mxu0 0.0
    %545 = vmatprep.subr.mxu0 0.0
    %546 = vmatpush2.msra.mxu0 0.0
    %547 = vmatprep.subr.mxu0 0.0
    %548 = vmatpush2.msra.mxu0 0.0
    %549 = vmatprep.subr.mxu0 0.0
    %550 = vmatpush2.msra.mxu0 0.0
    %551 = vmatprep.subr.mxu0 0.0
    %552 = vmatpush2.msra.mxu0 0.0
    %553 = vmatprep.subr.mxu0 0.0
    %554 = vmatpush2.msra.mxu0 0.0
    %555 = vmatprep.subr.mxu0 0.0
    %556 = vmatpush2.msra.mxu0 0.0
    %557 = vmatprep.subr.mxu0 0.0
    %558 = vmatpush2.msra.mxu0 0.0
    %559 = vmatprep.subr.mxu0 0.0
    %560 = vmatpush2.msra.mxu0 0.0
    %561 = vmatprep.subr.mxu0 0.0
    %562 = vmatpush2.msra.mxu0 0.0
    %563 = vmatprep.subr.mxu0 0.0
    %564 = vmatpush2.msra.mxu0 0.0
    %565 = vmatprep.mubr.f32.mxu0 0.0
    %566 = vmatmul.mubr.f32.gmra.mxu0 %v484
    %v567 = vpop.f32.mrf.mxu0
    %v568 = vadd.f32 0.0, %v567
    %v569 = vpop.f32.mrf.mxu0
    %570 = vdwg.mxu0
    %v571 = vrot.slane %v568, 4
    %v572 = vadd.f32 %v568, %v571
    %v573 = vrot.slane %v572, 2
    %v574 = vadd.f32 %v572, %v573
    %v575 = vrot.slane %v574, 1
    %v576 = vadd.f32 %v574, %v575
    %v577 = vmul.f32 %v576, %v204
    %v578 = vsub.f32 %v568, %v577
    %v579 = vmul.f32 %v578, %v578
    %v580 = vrot.slane %v579, 4
    %v581 = vadd.f32 %v579, %v580
    %v582 = vrot.slane %v581, 2
    %v583 = vadd.f32 %v581, %v582
    %v584 = vrot.slane %v583, 1
    %v585 = vadd.f32 %v583, %v584
    %v586 = vmul.f32 %v585, %v204
    %v587 = vld [vmem:[%s11] sm:$0x1]
    %v588 = vadd.f32 %v586, 1e-05
    %v589 = vrsqrt.pop %v588
    %v590 = vmul.f32 %v587, %v589
    %v592 = vlaneseq
    %v593 = vshrl.u32 %v592, 7
    %v594 = vsub.s32 0, %v593
    %v595 = vrot.slane %v590, %v594
    %v597 = vmul.f32 %v578, %v595
    %v598 = vld [vmem:[%s12] sm:$0x1]
    %v600 = vlaneseq
    %v601 = vshrl.u32 %v600, 7
    %v602 = vsub.s32 0, %v601
    %v603 = vrot.slane %v598, %v602
    %v605 = vadd.f32 %v597, %v603
    %v606 = vxor.u32 %v605, 2147483648
    %v607 = vmul.f32 %v606, 1.442695
    %v608 = vpow.pop %v607
    %v609 = vadd.f32 %v608, 1.0
    %v610 = vrcp.pop %v609
    %v611 = vmul.f32 1.0, %v610
    %612 = vst [vmem:[#allocation11] sm:$0xff] %v611
    // Predicated region
    $region74: #{tpu_custom_call.1} parent=1 // pred_check
      _
    $region75: #{tpu_custom_call.1} parent=1 // pred_check_branch
      %614 = sbr.rel (0) target = $region77
    $region76: #{tpu_custom_call.1} parent=1 // pred_region
      %s616 = ssub.s32 128, 128
      %617 = vsyncadd [#allocation4], %s616
      %s619 = sshll.u32 [#allocation11], 4
      %s620 = int_to_ptr.vmem [resolvable:$true] %s619
      %622 = dma.vmem_to_hbm [thread:$0]  %s620, 128, %s13, [#allocation4]
    $region77: #{tpu_custom_call.1} parent=1 // pred_fallthru
      _
    // Predicated region
    $region78: #{tpu_custom_call.1} parent=1 // pred_check
      _
    $region79: #{tpu_custom_call.1} parent=1 // pred_check_branch
      %624 = sbr.rel (0) target = $region81
    $region80: #{tpu_custom_call.1} parent=1 // pred_region
      %625 = dma.done [#allocation4], 128
    $region81: #{tpu_custom_call.1} parent=1 // pred_fallthru
      _
    %626 = vsyncpa [#allocation3], 1
    %627 = vsyncpa [#allocation6], 1
    %628 = vsyncpa [#allocation9], 1
    %629 = vsyncpa [#allocation4], 1

</llo_original>
